<compile_context>
chip_gen: v5e
topology: v5e:2x2
jax: 0.10.0
libtpu: 0.0.40
codegen_flags: <defaults>
</compile_context>

<pallas_src>
import functools

import numpy as np
import jax
import jax.numpy as jnp
from jax.experimental import pallas as pl
from jax.experimental.pallas import tpu as pltpu

DROPOUT = 0.05          # nn.Dropout(0.05) -> identity in eval mode
LEAKY_SLOPE = 0.2

_LANE = 128


# ---------------------------------------------------------------------------
# TPU generation queries (VMEM capacity, TensorCore count)
# ---------------------------------------------------------------------------
@functools.lru_cache(maxsize=None)
def _tpu_vmem_capacity_bytes():
    try:
        cap = getattr(pltpu.get_tpu_info(), "vmem_capacity_bytes", None)
        if cap:
            return int(cap)
    except Exception:
        pass
    return 64 << 20            # conservative default (v7x per-TensorCore VMEM)


@functools.lru_cache(maxsize=None)
def _is_multi_tensorcore():
    """True on 2-TensorCore-per-chip parts (v7x); False on v5e/v6e."""
    try:
        kind = jax.devices()[0].device_kind.lower()
        if "v7" in kind:
            return True
        if "v5" in kind or "v6" in kind:
            return False
    except Exception:
        pass
    return _tpu_vmem_capacity_bytes() <= (64 << 20)


# ---------------------------------------------------------------------------
# Tiling helpers
# ---------------------------------------------------------------------------
def _pick_tile(dim, max_tile, align=_LANE):
    """Largest `align`-aligned tile <= max_tile that divides `dim`, or the full
    extent when dim <= max_tile (full-extent exception to the (8,128) rule)."""
    if dim <= max_tile:
        return dim
    t = (max_tile // align) * align
    while t >= align:
        if dim % t == 0:
            return t
        t -= align
    return dim   # rare: no aligned divisor -> fall back to the full extent


def _pick_batch_tile(m, multi_tc):
    if multi_tc and m >= 2 * _LANE:
        # Guarantee >= 2 grid steps so both TensorCores on a v7x chip get work.
        cap = min(512, max(_LANE, m // 2))
    else:
        # Single TensorCore (v5e/v6e): larger tiles amortize per-step overhead.
        cap = 512
    tile = _pick_tile(m, cap)
    assert m % tile == 0, (m, tile)
    return tile


def _round_up(x, mult):
    return ((x + mult - 1) // mult) * mult


# ---------------------------------------------------------------------------
# Fully fused encoder kernel: all layers in one pallas_call, activations
# resident in VMEM, weights loaded as full (grid-invariant) blocks.
# ---------------------------------------------------------------------------
def _fused_encoder_kernel(*refs, n_hidden, leaky_slope, compute_dtype, pad):
    x_ref = refs[0]
    w_in_ref = refs[1]
    hidden_w_refs = refs[2:2 + n_hidden]
    head_w_ref = refs[2 + n_hidden]          # [fc_mean | fc_logvar] weights (d_last, 2L)
    head_b_ref = refs[3 + n_hidden]          # (1, 2L) float32
    out_ref = refs[4 + n_hidden]             # (tm, d_last + 2L + pad) lane-dense f32

    # Input Linear (bias=False): x cast to bf16 in-kernel, f32 MXU accumulation.
    h = jnp.dot(x_ref[...].astype(compute_dtype), w_in_ref[...],
                preferred_element_type=jnp.float32)

    # Hidden Linear(bias=False) + LeakyReLU(0.2); epilogue stays f32 on the VPU.
    for w_ref in hidden_w_refs:
        h = jnp.dot(h.astype(compute_dtype), w_ref[...],
                    preferred_element_type=jnp.float32)
        h = jnp.maximum(h, leaky_slope * h)          # LeakyReLU (0 < slope < 1)

    # nn.Dropout(0.05) is identity in eval mode.
    # Fused mean/logvar projection: one matmul + f32 bias add.
    head = jnp.dot(h.astype(compute_dtype), head_w_ref[...],
                   preferred_element_type=jnp.float32) + head_b_ref[...]

    # Single lane-dense store: [hidden | mean | logvar | zero-pad].
    parts = [h, head]
    if pad:
        parts.append(jnp.zeros((h.shape[0], pad), jnp.float32))
    out_ref[...] = jnp.concatenate(parts, axis=1).astype(out_ref.dtype)


def _fused_vmem_estimate(tm, embed, weight_shapes, two_l, out_width, w_itemsize,
                         weight_buffers=1):
    """Rough VMEM footprint of the fused kernel."""
    nbytes = 2 * tm * embed * 4                                 # f32 x blocks (2-buf)
    for ki, ni in weight_shapes:
        nbytes += weight_buffers * ki * ni * w_itemsize         # resident weights
    nbytes += weight_buffers * two_l * 4                        # bias
    nbytes += 2 * tm * out_width * 4                            # merged f32 output
    widest = max(ni for _, ni in weight_shapes)
    nbytes += 4 * tm * widest * 4                               # f32 intermediates slack
    return nbytes


def _fused_encoder_call(x, prepared, *, tm, out_width, pad, vmem_estimate,
                        weight_buffer_count):
    M, embed = x.shape
    hidden_ws = prepared["hidden_ws"]
    n_hidden = len(hidden_ws)
    compute_dtype = prepared["compute_dtype"]
    head_b = prepared["head_b"]
    w_list = [prepared["input_w"]] + list(hidden_ws) + [prepared["head_w"]]

    grid = (M // tm,)

    resident_kwargs = {}
    if weight_buffer_count is not None:
        # Weights/bias never change block index; single-buffering saves VMEM.
        resident_kwargs["pipeline_mode"] = pl.Buffered(weight_buffer_count)

    in_specs = [pl.BlockSpec((tm, embed), lambda i: (i, 0))]
    for w in w_list:
        in_specs.append(pl.BlockSpec(w.shape, lambda i: (0, 0), **resident_kwargs))
    in_specs.append(pl.BlockSpec(head_b.shape, lambda i: (0, 0), **resident_kwargs))

    out_specs = pl.BlockSpec((tm, out_width), lambda i: (i, 0))
    out_shape = jax.ShapeDtypeStruct((M, out_width), jnp.float32)

    cap = _tpu_vmem_capacity_bytes()
    vmem_limit = int(min(max(vmem_estimate + (8 << 20), 32 << 20), cap - (16 << 20)))

    kernel = functools.partial(
        _fused_encoder_kernel, n_hidden=n_hidden, leaky_slope=LEAKY_SLOPE,
        compute_dtype=compute_dtype, pad=pad)

    return pl.pallas_call(
        kernel,
        out_shape=out_shape,
        grid_spec=pltpu.PrefetchScalarGridSpec(
            num_scalar_prefetch=0,
            grid=grid,
            in_specs=in_specs,
            out_specs=out_specs,
        ),
        compiler_params=pltpu.CompilerParams(
            dimension_semantics=("parallel",),
            vmem_limit_bytes=vmem_limit,
        ),
    )(x, *w_list, head_b)


# ---------------------------------------------------------------------------
# Per-layer tiled fallback kernel (used only when the whole encoder's weights
# do not fit the fused-kernel VMEM budget, e.g. very large production shapes).
# ---------------------------------------------------------------------------
def _linear_kernel(x_ref, w_ref, *rest, has_bias, leaky_slope, compute_dtype):
    if has_bias:
        b_ref, o_ref, acc_ref = rest
    else:
        b_ref = None
        o_ref, acc_ref = rest

    k = pl.program_id(2)

    @pl.when(k == 0)
    def _():
        acc_ref[...] = jnp.zeros_like(acc_ref)

    acc_ref[...] += jnp.dot(x_ref[...].astype(compute_dtype), w_ref[...],
                            preferred_element_type=jnp.float32)

    @pl.when(k == pl.num_programs(2) - 1)
    def _():
        out = acc_ref[...]                              # f32 accumulator
        if has_bias:
            out = out + b_ref[...]                      # f32 bias add
        if leaky_slope is not None:
            out = jnp.maximum(out, leaky_slope * out)   # LeakyReLU (0 < slope < 1)
        o_ref[...] = out.astype(o_ref.dtype)


def pallas_linear(x, w, b=None, *, leaky_slope=None, out_dtype=jnp.float32,
                  compute_dtype=jnp.bfloat16):
    """y = leaky_relu(x @ w + b). `w` / `b` are pre-cast; x is cast to
    `compute_dtype` inside the kernel; f32 accumulation and epilogue."""
    M, K = x.shape
    K2, N = w.shape
    assert K == K2, (K, K2)
    has_bias = b is not None

    cap = _tpu_vmem_capacity_bytes()
    big_vmem = cap >= (96 << 20)                     # v5e / v6e: 128 MiB VMEM
    tm = _pick_tile(M, 256)
    tn = _pick_tile(N, 1024 if big_vmem else 512)
    tk = _pick_tile(K, 1024 if big_vmem else 512)
    assert M % tm == 0 and N % tn == 0 and K % tk == 0, (M, N, K, tm, tn, tk)
    grid = (M // tm, N // tn, K // tk)

    # Deeper buffering on the streamed weight when there are >= 3 K steps.
    w_spec_kwargs = {}
    if grid[2] >= 3:
        w_spec_kwargs["pipeline_mode"] = pl.Buffered(3)

    in_specs = [
        pl.BlockSpec((tm, tk), lambda i, j, k: (i, k)),
        pl.BlockSpec((tk, tn), lambda i, j, k: (k, j), **w_spec_kwargs),
    ]
    args = [x, w]
    if has_bias:
        in_specs.append(pl.BlockSpec((1, tn), lambda i, j, k: (0, j)))
        args.append(b)

    kernel = functools.partial(_linear_kernel, has_bias=has_bias,
                               leaky_slope=leaky_slope, compute_dtype=compute_dtype)
    return pl.pallas_call(
        kernel,
        out_shape=jax.ShapeDtypeStruct((M, N), out_dtype),
        grid_spec=pltpu.PrefetchScalarGridSpec(
            num_scalar_prefetch=0,
            grid=grid,
            in_specs=in_specs,
            out_specs=pl.BlockSpec((tm, tn), lambda i, j, k: (i, j)),
            scratch_shapes=[pltpu.VMEM((tm, tn), jnp.float32)],
        ),
        compiler_params=pltpu.CompilerParams(
            dimension_semantics=("parallel", "parallel", "arbitrary"),
            vmem_limit_bytes=int(min(cap // 2, 64 << 20)),
        ),
    )(*args)


# ---------------------------------------------------------------------------
# Parameter construction (deterministic, PyTorch-style uniform init)
# ---------------------------------------------------------------------------
def layer_sizes(num, latent_dim):
    sizes = [latent_dim * 2 ** i for i in range(num)]
    sizes.reverse()
    return sizes


def _uniform(key, shape, fan_in, dtype=jnp.float32):
    bound = 1.0 / jnp.sqrt(jnp.asarray(fan_in, dtype))
    return jax.random.uniform(key, shape, dtype, minval=-bound, maxval=bound)


def init_encoder_params(key, hidden_n, latent_dim, embed_dim, dtype=jnp.float32):
    """PyTorch-style U(-1/sqrt(fan_in), 1/sqrt(fan_in)); weights stored (in, out)."""
    hidden_dims = layer_sizes(hidden_n, latent_dim)
    keys = jax.random.split(key, 1 + hidden_n + 4)
    ki = iter(keys)

    params = {}
    params["input_w"] = _uniform(next(ki), (embed_dim, hidden_dims[0]),
                                 embed_dim, dtype)
    hidden_ws = []
    for i in range(hidden_n):
        dim = hidden_dims[i]
        # Mirrors the PyTorch module exactly: the last hidden layer is square
        # (dim, dim) because `next_dim = ... else dim`.
        next_dim = hidden_dims[i + 1] if i + 1 <= hidden_n - 1 else dim
        hidden_ws.append(_uniform(next(ki), (dim, next_dim), dim, dtype))
    params["hidden_ws"] = hidden_ws
    d_last = hidden_dims[-1]
    params["mean_w"] = _uniform(next(ki), (d_last, latent_dim), d_last, dtype)
    params["mean_b"] = _uniform(next(ki), (latent_dim,), d_last, dtype)
    params["logvar_w"] = _uniform(next(ki), (d_last, latent_dim), d_last, dtype)
    params["logvar_b"] = _uniform(next(ki), (latent_dim,), d_last, dtype)
    return params


def prepare_encoder_params(params, compute_dtype=jnp.bfloat16):
    """One-time prep: bf16 weight casts + mean/logvar head concatenation, so the
    per-forward wrapper performs no HBM passes of its own."""
    latent = int(params["mean_w"].shape[1])
    head_w = jnp.concatenate([params["mean_w"], params["logvar_w"]], axis=1)
    head_b = jnp.concatenate([params["mean_b"], params["logvar_b"]], axis=0)
    return {
        "input_w": params["input_w"].astype(compute_dtype),
        "hidden_ws": [w.astype(compute_dtype) for w in params["hidden_ws"]],
        "head_w": head_w.astype(compute_dtype),
        "head_b": head_b.reshape(1, 2 * latent).astype(jnp.float32),
        "latent": latent,
        "compute_dtype": compute_dtype,
    }


# ---------------------------------------------------------------------------
# Encoder forward
# ---------------------------------------------------------------------------
def encoder_forward(prepared, x, *, fuse=True):
    """Returns (hidden, mean, logvar), all float32.

    nn.Dropout(0.05) is identity in eval mode.
    # TODO(synk): stochastic training-mode dropout (pltpu.prng_*) not implemented.
    """
    latent = prepared["latent"]
    hidden_ws = prepared["hidden_ws"]
    d_last = hidden_ws[-1].shape[1] if hidden_ws else prepared["input_w"].shape[1]
    compute_dtype = prepared["compute_dtype"]
    two_l = 2 * latent
    M, embed = x.shape

    cap = _tpu_vmem_capacity_bytes()
    multi_tc = _is_multi_tensorcore()
    # ~44 MiB budget on v7x (64 MiB VMEM), ~100 MiB on v5e/v6e (128 MiB VMEM).
    fused_budget = min(cap - (20 << 20), 100 << 20)

    use_fused = bool(fuse)
    tm = out_width = pad = vmem_est = None
    if use_fused:
        tm = _pick_batch_tile(M, multi_tc)
        width = d_last + two_l
        out_width = _round_up(width, _LANE)
        pad = out_width - width
        w_shapes = ([prepared["input_w"].shape]
                    + [w.shape for w in hidden_ws]
                    + [prepared["head_w"].shape])
        vmem_est = _fused_vmem_estimate(
            tm, embed, w_shapes, two_l, out_width,
            np.dtype(compute_dtype).itemsize, weight_buffers=1)
        use_fused = vmem_est <= fused_budget

    if use_fused:
        kwargs = dict(tm=tm, out_width=out_width, pad=pad, vmem_estimate=vmem_est)
        try:
            merged = _fused_encoder_call(x, prepared, weight_buffer_count=1,
                                         **kwargs)
        except Exception:
            # pl.Buffered(1) single-buffering of grid-invariant weights is not
            # supported by this jax version; retry with default double-buffering.
            merged = _fused_encoder_call(x, prepared, weight_buffer_count=None,
                                         **kwargs)
        hidden = merged[:, :d_last]
        head = merged[:, d_last:d_last + two_l]
    else:
        # Per-layer tiled fallback: intermediates stream in bf16; only the
        # returned hidden and the head outputs stay f32.
        h = pallas_linear(
            x, prepared["input_w"],
            out_dtype=compute_dtype if hidden_ws else jnp.float32,
            compute_dtype=compute_dtype)
        n_hidden = len(hidden_ws)
        for idx, w in enumerate(hidden_ws):
            last = idx == n_hidden - 1
            h = pallas_linear(h, w, leaky_slope=LEAKY_SLOPE,
                              out_dtype=jnp.float32 if last else compute_dtype,
                              compute_dtype=compute_dtype)
        hidden = h
        head = pallas_linear(hidden, prepared["head_w"], prepared["head_b"],
                             out_dtype=jnp.float32, compute_dtype=compute_dtype)

    mean = head[:, :latent]
    logvar = head[:, latent:]
    return hidden, mean, logvar


# Pure-JAX reference using the SAME bf16-input / f32-accumulate matmul chain.
def encoder_forward_ref(params, x, compute_dtype=jnp.bfloat16):
    def mm(a, w):
        return jnp.dot(a.astype(compute_dtype), w.astype(compute_dtype),
                       preferred_element_type=jnp.float32)
    h = mm(x, params["input_w"])
    for w in params["hidden_ws"]:
        h = mm(h, w)
        h = jnp.where(h >= 0, h, LEAKY_SLOPE * h)
    mean = mm(h, params["mean_w"]) + params["mean_b"]
    logvar = mm(h, params["logvar_w"]) + params["logvar_b"]
    return h, mean, logvar


# Pure float32 reference (loose sanity check for the bf16 compute path).
def encoder_forward_f32_ref(params, x):
    h = x @ params["input_w"]
    for w in params["hidden_ws"]:
        h = h @ w
        h = jnp.where(h >= 0, h, LEAKY_SLOPE * h)
    mean = h @ params["mean_w"] + params["mean_b"]
    logvar = h @ params["logvar_w"] + params["logvar_b"]
    return h, mean, logvar


if __name__ == "__main__":
    # Small shapes consistent with the module (scaled down from 768/512/4):
    #   hidden_n=2, latent_dim=32, embed_dim=64  ->  hidden_dims = [64, 32]
    HIDDEN_N = 2
    LATENT_DIM = 32
    EMBED_DIM = 64
    BATCH = 8

    root = jax.random.PRNGKey(0)
    k_params, k_x = jax.random.split(root)
    params = init_encoder_params(k_params, HIDDEN_N, LATENT_DIM, EMBED_DIM)
    prepared = prepare_encoder_params(params)
    x = jax.random.normal(k_x, (BATCH, EMBED_DIM), jnp.float32)

    # Fused single-kernel path (used whenever the weights fit the VMEM budget).
    out_fused = encoder_forward(prepared, x, fuse=True)
    # Per-layer tiled fallback path (used for very large production shapes).
    out_layered = encoder_forward(prepared, x, fuse=False)
    jax.block_until_ready((out_fused, out_layered))

    h_ref, m_ref, lv_ref = encoder_forward_ref(params, x)       # same-precision ref
    h_f32, m_f32, lv_f32 = encoder_forward_f32_ref(params, x)   # pure f32 ref

    d_last = layer_sizes(HIDDEN_N, LATENT_DIM)[-1]
    for name, (hid, mn, lv) in (("fused", out_fused), ("layered", out_layered)):
        assert hid.shape == (BATCH, d_last), (name, hid.shape)
        assert mn.shape == (BATCH, LATENT_DIM), (name, mn.shape)
        assert lv.shape == (BATCH, LATENT_DIM), (name, lv.shape)
        # Tight check vs. a reference using the same bf16-input matmuls.
        assert jnp.allclose(hid, h_ref, atol=2e-3, rtol=2e-3), name
        assert jnp.allclose(mn, m_ref, atol=2e-3, rtol=2e-3), name
        assert jnp.allclose(lv, lv_ref, atol=2e-3, rtol=2e-3), name
        # Loose sanity check vs. the pure-f32 reference (bf16 rounding allowed).
        assert jnp.allclose(hid, h_f32, atol=1e-1, rtol=1e-1), name
        assert jnp.allclose(mn, m_f32, atol=1e-1, rtol=1e-1), name
        assert jnp.allclose(lv, lv_f32, atol=1e-1, rtol=1e-1), name

    print("KERNEL_OK")
</pallas_src>

<mosaic_0001>
module attributes {stable_mosaic.version = 11 : i64} {
  func.func @_fused_encoder_kernel(%arg0: i32, %arg1: memref<8x64xf32, #tpu.memory_space<vmem>>, %arg2: memref<64x64xbf16, #tpu.memory_space<vmem>>, %arg3: memref<64x32xbf16, #tpu.memory_space<vmem>>, %arg4: memref<32x32xbf16, #tpu.memory_space<vmem>>, %arg5: memref<32x64xbf16, #tpu.memory_space<vmem>>, %arg6: memref<1x64xf32, #tpu.memory_space<vmem>>, %arg7: memref<8x128xf32, #tpu.memory_space<vmem>>) attributes {dimension_semantics = [#tpu.dimension_semantics<parallel>], iteration_bounds = array<i64: 1>, scalar_prefetch = 0 : i64, scratch_operands = 0 : i64, tpu.core_type = #tpu.core_type<tc>, window_params = [{transform_indices = @transform_0, window_bounds = array<i64: 8, 64>}, {pipeline_mode = #tpu.pipeline_mode<synchronous>, transform_indices = @transform_1, window_bounds = array<i64: 64, 64>}, {pipeline_mode = #tpu.pipeline_mode<synchronous>, transform_indices = @transform_2, window_bounds = array<i64: 64, 32>}, {pipeline_mode = #tpu.pipeline_mode<synchronous>, transform_indices = @transform_3, window_bounds = array<i64: 32, 32>}, {pipeline_mode = #tpu.pipeline_mode<synchronous>, transform_indices = @transform_4, window_bounds = array<i64: 32, 64>}, {pipeline_mode = #tpu.pipeline_mode<synchronous>, transform_indices = @transform_5, window_bounds = array<i64: 1, 64>}, {transform_indices = @transform_6, window_bounds = array<i64: 8, 128>}]} {
    %c0 = arith.constant 0 : index
    %c0_0 = arith.constant 0 : index
    %0 = vector.load %arg1[%c0, %c0_0] : memref<8x64xf32, #tpu.memory_space<vmem>>, vector<8x64xf32>
    %1 = arith.truncf %0 : vector<8x64xf32> to vector<8x64xbf16>
    %c0_1 = arith.constant 0 : index
    %c0_2 = arith.constant 0 : index
    %2 = vector.load %arg2[%c0_1, %c0_2] : memref<64x64xbf16, #tpu.memory_space<vmem>>, vector<64x64xbf16>
    %cst = arith.constant dense<0.000000e+00> : vector<8x64xf32>
    %3 = tpu.matmul %1, %2, %cst {dimension_numbers = #tpu.dot_dimension_numbers<[1], [0], [0], [1], [0, 0, 1, 1], [], []>} : vector<8x64xbf16>, vector<64x64xbf16>, vector<8x64xf32> -> vector<8x64xf32>
    %4 = arith.truncf %3 : vector<8x64xf32> to vector<8x64xbf16>
    %c0_3 = arith.constant 0 : index
    %c0_4 = arith.constant 0 : index
    %5 = vector.load %arg3[%c0_3, %c0_4] : memref<64x32xbf16, #tpu.memory_space<vmem>>, vector<64x32xbf16>
    %cst_5 = arith.constant dense<0.000000e+00> : vector<8x32xf32>
    %6 = tpu.matmul %4, %5, %cst_5 {dimension_numbers = #tpu.dot_dimension_numbers<[1], [0], [0], [1], [0, 0, 1, 1], [], []>} : vector<8x64xbf16>, vector<64x32xbf16>, vector<8x32xf32> -> vector<8x32xf32>
    %cst_6 = arith.constant 2.000000e-01 : f32
    %7 = vector.broadcast %cst_6 : f32 to vector<8x32xf32>
    %8 = arith.mulf %7, %6 : vector<8x32xf32>
    %9 = arith.maximumf %6, %8 : vector<8x32xf32>
    %10 = arith.truncf %9 : vector<8x32xf32> to vector<8x32xbf16>
    %c0_7 = arith.constant 0 : index
    %c0_8 = arith.constant 0 : index
    %11 = vector.load %arg4[%c0_7, %c0_8] : memref<32x32xbf16, #tpu.memory_space<vmem>>, vector<32x32xbf16>
    %cst_9 = arith.constant dense<0.000000e+00> : vector<8x32xf32>
    %12 = tpu.matmul %10, %11, %cst_9 {dimension_numbers = #tpu.dot_dimension_numbers<[1], [0], [0], [1], [0, 0, 1, 1], [], []>} : vector<8x32xbf16>, vector<32x32xbf16>, vector<8x32xf32> -> vector<8x32xf32>
    %cst_10 = arith.constant 2.000000e-01 : f32
    %13 = vector.broadcast %cst_10 : f32 to vector<8x32xf32>
    %14 = arith.mulf %13, %12 : vector<8x32xf32>
    %15 = arith.maximumf %12, %14 : vector<8x32xf32>
    %16 = arith.truncf %15 : vector<8x32xf32> to vector<8x32xbf16>
    %c0_11 = arith.constant 0 : index
    %c0_12 = arith.constant 0 : index
    %17 = vector.load %arg5[%c0_11, %c0_12] : memref<32x64xbf16, #tpu.memory_space<vmem>>, vector<32x64xbf16>
    %cst_13 = arith.constant dense<0.000000e+00> : vector<8x64xf32>
    %18 = tpu.matmul %16, %17, %cst_13 {dimension_numbers = #tpu.dot_dimension_numbers<[1], [0], [0], [1], [0, 0, 1, 1], [], []>} : vector<8x32xbf16>, vector<32x64xbf16>, vector<8x64xf32> -> vector<8x64xf32>
    %c0_14 = arith.constant 0 : index
    %c0_15 = arith.constant 0 : index
    %19 = vector.load %arg6[%c0_14, %c0_15] : memref<1x64xf32, #tpu.memory_space<vmem>>, vector<1x64xf32>
    %20 = vector.broadcast %19 : vector<1x64xf32> to vector<8x64xf32>
    %21 = arith.addf %18, %20 : vector<8x64xf32>
    %cst_16 = arith.constant 0.000000e+00 : f32
    %22 = vector.broadcast %cst_16 : f32 to vector<8x32xf32>
    %23 = tpu.concatenate %15, %21, %22 in 1 : vector<8x32xf32>, vector<8x64xf32>, vector<8x32xf32> -> vector<8x128xf32>
    %c0_17 = arith.constant 0 : index
    %c0_18 = arith.constant 0 : index
    %24 = vector.load %arg7[%c0_17, %c0_18] : memref<8x128xf32, #tpu.memory_space<vmem>>, vector<8x128xf32>
    tpu.vector_store %arg7[%c0_17, %c0_18], %23 {strides = array<i32>} : memref<8x128xf32, #tpu.memory_space<vmem>>, vector<8x128xf32>,
    return
  }
  func.func @transform_0(%arg0: i32) -> (i32, i32) {
    %c0_i32 = arith.constant 0 : i32
    %c0_i32_0 = arith.constant 0 : i32
    return %arg0, %c0_i32 : i32, i32
  }
  func.func @transform_1(%arg0: i32) -> (i32, i32) {
    %c0_i32 = arith.constant 0 : i32
    %c0_i32_0 = arith.constant 0 : i32
    %c0_i32_1 = arith.constant 0 : i32
    return %c0_i32, %c0_i32_0 : i32, i32
  }
  func.func @transform_2(%arg0: i32) -> (i32, i32) {
    %c0_i32 = arith.constant 0 : i32
    %c0_i32_0 = arith.constant 0 : i32
    %c0_i32_1 = arith.constant 0 : i32
    return %c0_i32, %c0_i32_0 : i32, i32
  }
  func.func @transform_3(%arg0: i32) -> (i32, i32) {
    %c0_i32 = arith.constant 0 : i32
    %c0_i32_0 = arith.constant 0 : i32
    %c0_i32_1 = arith.constant 0 : i32
    return %c0_i32, %c0_i32_0 : i32, i32
  }
  func.func @transform_4(%arg0: i32) -> (i32, i32) {
    %c0_i32 = arith.constant 0 : i32
    %c0_i32_0 = arith.constant 0 : i32
    %c0_i32_1 = arith.constant 0 : i32
    return %c0_i32, %c0_i32_0 : i32, i32
  }
  func.func @transform_5(%arg0: i32) -> (i32, i32) {
    %c0_i32 = arith.constant 0 : i32
    %c0_i32_0 = arith.constant 0 : i32
    %c0_i32_1 = arith.constant 0 : i32
    return %c0_i32, %c0_i32_0 : i32, i32
  }
  func.func @transform_6(%arg0: i32) -> (i32, i32) {
    %c0_i32 = arith.constant 0 : i32
    %c0_i32_0 = arith.constant 0 : i32
    return %arg0, %c0_i32 : i32, i32
  }
}

module attributes {stable_mosaic.version = 11 : i64} {
  func.func @_fused_encoder_kernel(%arg0: i32, %arg1: memref<8x64xf32, #tpu.memory_space<vmem>>, %arg2: memref<64x64xbf16, #tpu.memory_space<vmem>>, %arg3: memref<64x32xbf16, #tpu.memory_space<vmem>>, %arg4: memref<32x32xbf16, #tpu.memory_space<vmem>>, %arg5: memref<32x64xbf16, #tpu.memory_space<vmem>>, %arg6: memref<1x64xf32, #tpu.memory_space<vmem>>, %arg7: memref<8x128xf32, #tpu.memory_space<vmem>>) attributes {dimension_semantics = [#tpu.dimension_semantics<parallel>], iteration_bounds = array<i64: 1>, scalar_prefetch = 0 : i64, scratch_operands = 0 : i64, tpu.core_type = #tpu.core_type<tc>, window_params = [{transform_indices = @transform_0, window_bounds = array<i64: 8, 64>}, {pipeline_mode = #tpu.pipeline_mode<synchronous>, transform_indices = @transform_1, window_bounds = array<i64: 64, 64>}, {pipeline_mode = #tpu.pipeline_mode<synchronous>, transform_indices = @transform_2, window_bounds = array<i64: 64, 32>}, {pipeline_mode = #tpu.pipeline_mode<synchronous>, transform_indices = @transform_3, window_bounds = array<i64: 32, 32>}, {pipeline_mode = #tpu.pipeline_mode<synchronous>, transform_indices = @transform_4, window_bounds = array<i64: 32, 64>}, {pipeline_mode = #tpu.pipeline_mode<synchronous>, transform_indices = @transform_5, window_bounds = array<i64: 1, 64>}, {transform_indices = @transform_6, window_bounds = array<i64: 8, 128>}]} {
    %c0 = arith.constant 0 : index
    %c0_0 = arith.constant 0 : index
    %0 = vector.load %arg1[%c0, %c0_0] : memref<8x64xf32, #tpu.memory_space<vmem>>, vector<8x64xf32>
    %1 = arith.truncf %0 : vector<8x64xf32> to vector<8x64xbf16>
    %c0_1 = arith.constant 0 : index
    %c0_2 = arith.constant 0 : index
    %2 = vector.load %arg2[%c0_1, %c0_2] : memref<64x64xbf16, #tpu.memory_space<vmem>>, vector<64x64xbf16>
    %cst = arith.constant dense<0.000000e+00> : vector<8x64xf32>
    %3 = tpu.matmul %1, %2, %cst {dimension_numbers = #tpu.dot_dimension_numbers<[1], [0], [0], [1], [0, 0, 1, 1], [], []>} : vector<8x64xbf16>, vector<64x64xbf16>, vector<8x64xf32> -> vector<8x64xf32>
    %4 = arith.truncf %3 : vector<8x64xf32> to vector<8x64xbf16>
    %c0_3 = arith.constant 0 : index
    %c0_4 = arith.constant 0 : index
    %5 = vector.load %arg3[%c0_3, %c0_4] : memref<64x32xbf16, #tpu.memory_space<vmem>>, vector<64x32xbf16>
    %cst_5 = arith.constant dense<0.000000e+00> : vector<8x32xf32>
    %6 = tpu.matmul %4, %5, %cst_5 {dimension_numbers = #tpu.dot_dimension_numbers<[1], [0], [0], [1], [0, 0, 1, 1], [], []>} : vector<8x64xbf16>, vector<64x32xbf16>, vector<8x32xf32> -> vector<8x32xf32>
    %cst_6 = arith.constant 2.000000e-01 : f32
    %7 = vector.broadcast %cst_6 : f32 to vector<8x32xf32>
    %8 = arith.mulf %7, %6 : vector<8x32xf32>
    %9 = arith.maximumf %6, %8 : vector<8x32xf32>
    %10 = arith.truncf %9 : vector<8x32xf32> to vector<8x32xbf16>
    %c0_7 = arith.constant 0 : index
    %c0_8 = arith.constant 0 : index
    %11 = vector.load %arg4[%c0_7, %c0_8] : memref<32x32xbf16, #tpu.memory_space<vmem>>, vector<32x32xbf16>
    %cst_9 = arith.constant dense<0.000000e+00> : vector<8x32xf32>
    %12 = tpu.matmul %10, %11, %cst_9 {dimension_numbers = #tpu.dot_dimension_numbers<[1], [0], [0], [1], [0, 0, 1, 1], [], []>} : vector<8x32xbf16>, vector<32x32xbf16>, vector<8x32xf32> -> vector<8x32xf32>
    %cst_10 = arith.constant 2.000000e-01 : f32
    %13 = vector.broadcast %cst_10 : f32 to vector<8x32xf32>
    %14 = arith.mulf %13, %12 : vector<8x32xf32>
    %15 = arith.maximumf %12, %14 : vector<8x32xf32>
    %16 = arith.truncf %15 : vector<8x32xf32> to vector<8x32xbf16>
    %c0_11 = arith.constant 0 : index
    %c0_12 = arith.constant 0 : index
    %17 = vector.load %arg5[%c0_11, %c0_12] : memref<32x64xbf16, #tpu.memory_space<vmem>>, vector<32x64xbf16>
    %cst_13 = arith.constant dense<0.000000e+00> : vector<8x64xf32>
    %18 = tpu.matmul %16, %17, %cst_13 {dimension_numbers = #tpu.dot_dimension_numbers<[1], [0], [0], [1], [0, 0, 1, 1], [], []>} : vector<8x32xbf16>, vector<32x64xbf16>, vector<8x64xf32> -> vector<8x64xf32>
    %c0_14 = arith.constant 0 : index
    %c0_15 = arith.constant 0 : index
    %19 = vector.load %arg6[%c0_14, %c0_15] : memref<1x64xf32, #tpu.memory_space<vmem>>, vector<1x64xf32>
    %20 = vector.broadcast %19 : vector<1x64xf32> to vector<8x64xf32>
    %21 = arith.addf %18, %20 : vector<8x64xf32>
    %cst_16 = arith.constant 0.000000e+00 : f32
    %22 = vector.broadcast %cst_16 : f32 to vector<8x32xf32>
    %23 = tpu.concatenate %15, %21, %22 in 1 : vector<8x32xf32>, vector<8x64xf32>, vector<8x32xf32> -> vector<8x128xf32>
    %c0_17 = arith.constant 0 : index
    %c0_18 = arith.constant 0 : index
    %24 = vector.load %arg7[%c0_17, %c0_18] : memref<8x128xf32, #tpu.memory_space<vmem>>, vector<8x128xf32>
    tpu.vector_store %arg7[%c0_17, %c0_18], %23 {strides = array<i32>} : memref<8x128xf32, #tpu.memory_space<vmem>>, vector<8x128xf32>,
    return
  }
  func.func @transform_0(%arg0: i32) -> (i32, i32) {
    %c0_i32 = arith.constant 0 : i32
    %c0_i32_0 = arith.constant 0 : i32
    return %arg0, %c0_i32 : i32, i32
  }
  func.func @transform_1(%arg0: i32) -> (i32, i32) {
    %c0_i32 = arith.constant 0 : i32
    %c0_i32_0 = arith.constant 0 : i32
    %c0_i32_1 = arith.constant 0 : i32
    return %c0_i32, %c0_i32_0 : i32, i32
  }
  func.func @transform_2(%arg0: i32) -> (i32, i32) {
    %c0_i32 = arith.constant 0 : i32
    %c0_i32_0 = arith.constant 0 : i32
    %c0_i32_1 = arith.constant 0 : i32
    return %c0_i32, %c0_i32_0 : i32, i32
  }
  func.func @transform_3(%arg0: i32) -> (i32, i32) {
    %c0_i32 = arith.constant 0 : i32
    %c0_i32_0 = arith.constant 0 : i32
    %c0_i32_1 = arith.constant 0 : i32
    return %c0_i32, %c0_i32_0 : i32, i32
  }
  func.func @transform_4(%arg0: i32) -> (i32, i32) {
    %c0_i32 = arith.constant 0 : i32
    %c0_i32_0 = arith.constant 0 : i32
    %c0_i32_1 = arith.constant 0 : i32
    return %c0_i32, %c0_i32_0 : i32, i32
  }
  func.func @transform_5(%arg0: i32) -> (i32, i32) {
    %c0_i32 = arith.constant 0 : i32
    %c0_i32_0 = arith.constant 0 : i32
    %c0_i32_1 = arith.constant 0 : i32
    return %c0_i32, %c0_i32_0 : i32, i32
  }
  func.func @transform_6(%arg0: i32) -> (i32, i32) {
    %c0_i32 = arith.constant 0 : i32
    %c0_i32_0 = arith.constant 0 : i32
    return %arg0, %c0_i32 : i32, i32
  }
}

</mosaic_0001>

<llo_original>
// kernel: tpu_custom_call.1
$region0: #{tpu_custom_call.1}
  #allocation0 [shape = 'u32[]', space=smem, size = 0x4, offset = 0x4, fixed_abs, tag = 'smem constant byte address 0x4 - core index']
  #allocation1 [shape = 'u32[72,128]{1,0:T(1,128)}', space=vmem, size = 0x9000, scoped, tag = 'internal scratch']
  %s0 = inlined_call_operand.hbm [shape: f32[8,64], index: 0, kind: input, shape index: {}]
  %s1 = inlined_call_operand.vmem [shape: bf16[64,64], index: 1, kind: input, shape index: {}]
  %s2 = inlined_call_operand.vmem [shape: bf16[64,32], index: 2, kind: input, shape index: {}]
  %s3 = inlined_call_operand.vmem [shape: bf16[32,32], index: 3, kind: input, shape index: {}]
  %s4 = inlined_call_operand.hbm [shape: bf16[32,64], index: 4, kind: input, shape index: {}]
  %s5 = inlined_call_operand.vmem [shape: f32[1,64], index: 5, kind: input, shape index: {}]
  %s6 = inlined_call_operand.hbm [shape: f32[8,128], index: 6, kind: output, shape index: {}]
  %s7 = sld [smem:[#allocation0]]
  $region42: #{tpu_custom_call.1} parent=0
    _
  %s9 = ssub.s32 1, %s7
  %s10 = scalar_select 0, %s9, %s7
  $region1: #{tpu_custom_call.1} parent=0
    #allocation2 [shape = 'u8[4096]{0}', space=vmem, size = 0x1000, scoped, tag = 'input window, operand 0, single buffered']
    #allocation3 [shape = 's32[1]{0}', space=sflag, size = 0x4, scoped, tag = 'scoped memory for tpu_custom_call.1']
    #allocation4 [shape = 's32[1]{0}', space=sflag, size = 0x4, scoped, tag = 'scoped memory for tpu_custom_call.1']
    #allocation5 [shape = 'u8[8192]{0}', space=vmem, size = 0x2000, scoped, tag = 'input window, operand 4, single buffered']
    #allocation6 [shape = 's32[1]{0}', space=sflag, size = 0x4, scoped, tag = 'scoped memory for tpu_custom_call.1']
    #allocation7 [shape = 'u8[4096]{0}', space=vmem, size = 0x1000, scoped, tag = 'output window, operand 0, single buffered']
    %11 = vsyncpa [#allocation3], 0
    %12 = vsyncpa [#allocation6], 0
    %13 = vsyncpa [#allocation4], 0
    // Predicated region
    $region2: #{tpu_custom_call.1} parent=1 // pred_check
      _
    $region3: #{tpu_custom_call.1} parent=1 // pred_check_branch
      %15 = sbr.rel (0) target = $region5
    $region4: #{tpu_custom_call.1} parent=1 // pred_region
      %17 = vsyncadd [#allocation3], 0
      %s19 = sshll.u32 %s0, 4
      %s20 = int_to_ptr.hbm [resolvable:$true] %s19
      %s21 = sshll.u32 [#allocation2], 4
      %s22 = int_to_ptr.vmem [resolvable:$true] %s21
      %24 = dma.hbm_to_vmem [thread:$0]  %s20, 128, %s22, [#allocation3]
    $region5: #{tpu_custom_call.1} parent=1 // pred_fallthru
      _
    // Predicated region
    $region6: #{tpu_custom_call.1} parent=1 // pred_check
      _
    $region7: #{tpu_custom_call.1} parent=1 // pred_check_branch
      %26 = sbr.rel (0) target = $region9
    $region8: #{tpu_custom_call.1} parent=1 // pred_region
      _
    $region9: #{tpu_custom_call.1} parent=1 // pred_fallthru
      _
    // Predicated region
    $region10: #{tpu_custom_call.1} parent=1 // pred_check
      _
    $region11: #{tpu_custom_call.1} parent=1 // pred_check_branch
      %28 = sbr.rel (0) target = $region13
    $region12: #{tpu_custom_call.1} parent=1 // pred_region
      _
    $region13: #{tpu_custom_call.1} parent=1 // pred_fallthru
      _
    // Predicated region
    $region14: #{tpu_custom_call.1} parent=1 // pred_check
      _
    $region15: #{tpu_custom_call.1} parent=1 // pred_check_branch
      %30 = sbr.rel (0) target = $region17
    $region16: #{tpu_custom_call.1} parent=1 // pred_region
      _
    $region17: #{tpu_custom_call.1} parent=1 // pred_fallthru
      _
    // Predicated region
    $region18: #{tpu_custom_call.1} parent=1 // pred_check
      _
    $region19: #{tpu_custom_call.1} parent=1 // pred_check_branch
      %32 = sbr.rel (0) target = $region21
    $region20: #{tpu_custom_call.1} parent=1 // pred_region
      %34 = vsyncadd [#allocation6], 0
      %s35 = sshll.u32 %s4, 4
      %s36 = int_to_ptr.hbm [resolvable:$true] %s35
      %s37 = sshll.u32 [#allocation5], 4
      %s38 = int_to_ptr.vmem [resolvable:$true] %s37
      %43 = dma.hbm_to_vmem [thread:$0]  %s36, 256, %s38, [#allocation6], 64, 64, 4
    $region21: #{tpu_custom_call.1} parent=1 // pred_fallthru
      _
    // Predicated region
    $region22: #{tpu_custom_call.1} parent=1 // pred_check
      _
    $region23: #{tpu_custom_call.1} parent=1 // pred_check_branch
      %45 = sbr.rel (0) target = $region25
    $region24: #{tpu_custom_call.1} parent=1 // pred_region
      _
    $region25: #{tpu_custom_call.1} parent=1 // pred_fallthru
      _
    // Predicated region
    $region26: #{tpu_custom_call.1} parent=1 // pred_check
      _
    $region27: #{tpu_custom_call.1} parent=1 // pred_check_branch
      %47 = sbr.rel (0) target = $region29
    $region28: #{tpu_custom_call.1} parent=1 // pred_region
      %49 = dma.done [#allocation3], 128
    $region29: #{tpu_custom_call.1} parent=1 // pred_fallthru
      _
    // Predicated region
    $region30: #{tpu_custom_call.1} parent=1 // pred_check
      _
    $region31: #{tpu_custom_call.1} parent=1 // pred_check_branch
      %51 = sbr.rel (0) target = $region33
    $region32: #{tpu_custom_call.1} parent=1 // pred_region
      %53 = dma.done [#allocation6], 256
    $region33: #{tpu_custom_call.1} parent=1 // pred_fallthru
      _
    %v55 = vld [vmem:[#allocation2] sm:$0xff]
    %v56 = vpack.c.bf16 %v55, %v55
    %v57 = vld [vmem:[%s1] sm:$0xf]
    %v58 = vld [vmem:[%s1 + $0x4] sm:$0xf]
    %v59 = vld [vmem:[%s1 + $0x8] sm:$0xf]
    %v60 = vld [vmem:[%s1 + $0xc] sm:$0xf]
    %v61 = vld [vmem:[%s1 + $0x10] sm:$0xf]
    %v62 = vld [vmem:[%s1 + $0x14] sm:$0xf]
    %v63 = vld [vmem:[%s1 + $0x18] sm:$0xf]
    %v64 = vld [vmem:[%s1 + $0x1c] sm:$0xf]
    %v73 = vunpack.c.l.b16 %v57
    %v74 = vunpack.c.l.b16 %v58
    %v75 = vunpack.c.l.b16 %v59
    %v76 = vunpack.c.l.b16 %v60
    %v77 = vunpack.c.l.b16 %v61
    %v78 = vunpack.c.l.b16 %v62
    %v79 = vunpack.c.l.b16 %v63
    %v80 = vunpack.c.l.b16 %v64
    %v81 = vpack.c.b16 %v74, %v73
    %v82 = vpack.c.b16 %v76, %v75
    %v83 = vpack.c.b16 %v78, %v77
    %v84 = vpack.c.b16 %v80, %v79
    %vm89 = vcmask 523264
    %v91 = vsel %vm89, %v56, 0
    %93 = vmatpush.bf16.msra.mxu0 0
    %94 = vmatpush.bf16.msra.mxu0 0
    %95 = vmatpush.bf16.msra.mxu0 0
    %96 = vmatpush.bf16.msra.mxu0 0
    %97 = vmatpush.bf16.msra.mxu0 %v84
    %98 = vmatpush.bf16.msra.mxu0 %v83
    %99 = vmatpush.bf16.msra.mxu0 %v82
    %100 = vmatpush.bf16.msra.mxu0 %v81
    %101 = vmatmul.bf16.gmra.mxu0 %v91
    %v102 = vpop.f32.mrf.mxu0
    %v103 = vadd.f32 0.0, %v102
    %v104 = vpop.f32.mrf.mxu0
    %105 = vdwg.mxu0
    %v106 = vpack.c.bf16 %v103, %v103
    %v107 = vld [vmem:[%s2] sm:$0xf]
    %v108 = vld [vmem:[%s2 + $0x4] sm:$0xf]
    %v109 = vld [vmem:[%s2 + $0x8] sm:$0xf]
    %v110 = vld [vmem:[%s2 + $0xc] sm:$0xf]
    %v111 = vld [vmem:[%s2 + $0x10] sm:$0xf]
    %v112 = vld [vmem:[%s2 + $0x14] sm:$0xf]
    %v113 = vld [vmem:[%s2 + $0x18] sm:$0xf]
    %v114 = vld [vmem:[%s2 + $0x1c] sm:$0xf]
    %v123 = vunpack.c.l.b16 %v107
    %v124 = vunpack.c.l.b16 %v108
    %v125 = vunpack.c.l.b16 %v109
    %v126 = vunpack.c.l.b16 %v110
    %v127 = vunpack.c.l.b16 %v111
    %v128 = vunpack.c.l.b16 %v112
    %v129 = vunpack.c.l.b16 %v113
    %v130 = vunpack.c.l.b16 %v114
    %v131 = vpack.c.b16 %v124, %v123
    %v132 = vpack.c.b16 %v126, %v125
    %v133 = vpack.c.b16 %v128, %v127
    %v134 = vpack.c.b16 %v130, %v129
    %v140 = vsel %vm89, %v106, 0
    %142 = vmatpush.bf16.msra.mxu0 0
    %143 = vmatpush.bf16.msra.mxu0 0
    %144 = vmatpush.bf16.msra.mxu0 0
    %145 = vmatpush.bf16.msra.mxu0 0
    %146 = vmatpush.bf16.msra.mxu0 %v134
    %147 = vmatpush.bf16.msra.mxu0 %v133
    %148 = vmatpush.bf16.msra.mxu0 %v132
    %149 = vmatpush.bf16.msra.mxu0 %v131
    %150 = vmatmul.bf16.gmra.mxu0 %v140
    %v151 = vpop.f32.mrf.mxu0
    %v152 = vadd.f32 0.0, %v151
    %v153 = vpop.f32.mrf.mxu0
    %154 = vdwg.mxu0
    %v155 = vmul.f32 %v152, 0.2
    %v156 = vmax.f32 %v152, %v155
    %v157 = vpack.c.bf16 %v156, %v156
    %v158 = vld [vmem:[%s3] sm:$0xf]
    %v159 = vld [vmem:[%s3 + $0x4] sm:$0xf]
    %v160 = vld [vmem:[%s3 + $0x8] sm:$0xf]
    %v161 = vld [vmem:[%s3 + $0xc] sm:$0xf]
    %v166 = vunpack.c.l.b16 %v158
    %v167 = vunpack.c.l.b16 %v159
    %v168 = vunpack.c.l.b16 %v160
    %v169 = vunpack.c.l.b16 %v161
    %v170 = vpack.c.b16 %v167, %v166
    %v171 = vpack.c.b16 %v169, %v168
    %vm174 = vcmask 261120
    %v176 = vsel %vm174, %v157, 0
    %178 = vmatpush.bf16.msra.mxu0 0
    %179 = vmatpush.bf16.msra.mxu0 0
    %180 = vmatpush.bf16.msra.mxu0 0
    %181 = vmatpush.bf16.msra.mxu0 0
    %182 = vmatpush.bf16.msra.mxu0 0
    %183 = vmatpush.bf16.msra.mxu0 0
    %184 = vmatpush.bf16.msra.mxu0 %v171
    %185 = vmatpush.bf16.msra.mxu0 %v170
    %186 = vmatmul.bf16.gmra.mxu0 %v176
    %v187 = vpop.f32.mrf.mxu0
    %v188 = vadd.f32 0.0, %v187
    %v189 = vpop.f32.mrf.mxu0
    %190 = vdwg.mxu0
    %v191 = vmul.f32 %v188, 0.2
    %v192 = vmax.f32 %v188, %v191
    %v193 = vpack.c.bf16 %v192, %v192
    %v194 = vld [vmem:[#allocation5] sm:$0xf]
    %v195 = vld [vmem:[#allocation5 + $0x4] sm:$0xf]
    %v196 = vld [vmem:[#allocation5 + $0x8] sm:$0xf]
    %v197 = vld [vmem:[#allocation5 + $0xc] sm:$0xf]
    %v198 = vld [vmem:[%s5] sm:$0x1]
    %v200 = vperm.slane %v198, 0
    %v206 = vunpack.c.l.b16 %v194
    %v207 = vunpack.c.l.b16 %v195
    %v208 = vunpack.c.l.b16 %v196
    %v209 = vunpack.c.l.b16 %v197
    %v210 = vpack.c.b16 %v207, %v206
    %v211 = vpack.c.b16 %v209, %v208
    %v215 = vsel %vm174, %v193, 0
    %217 = vmatpush.bf16.msra.mxu0 0
    %218 = vmatpush.bf16.msra.mxu0 0
    %219 = vmatpush.bf16.msra.mxu0 0
    %220 = vmatpush.bf16.msra.mxu0 0
    %221 = vmatpush.bf16.msra.mxu0 0
    %222 = vmatpush.bf16.msra.mxu0 0
    %223 = vmatpush.bf16.msra.mxu0 %v211
    %224 = vmatpush.bf16.msra.mxu0 %v210
    %225 = vmatmul.bf16.gmra.mxu0 %v215
    %v226 = vpop.f32.mrf.mxu0
    %v227 = vadd.f32 %v200, %v226
    %v228 = vpop.f32.mrf.mxu0
    %229 = vdwg.mxu0
    %231 = vrot.lane.b32.xlu0 %v227, 32
    %v232 = vpop.permute.xlu0 %231
    %v234 = vsel %vm174, %v192, %v232
    %vm235 = vcmask 785408
    %v236 = vsel %vm235, %v234, 0.0
    %237 = vst [vmem:[#allocation7] sm:$0xff] %v236
    // Predicated region
    $region34: #{tpu_custom_call.1} parent=1 // pred_check
      _
    $region35: #{tpu_custom_call.1} parent=1 // pred_check_branch
      %239 = sbr.rel (0) target = $region37
    $region36: #{tpu_custom_call.1} parent=1 // pred_region
      %241 = vsyncadd [#allocation4], 0
      %s243 = sshll.u32 [#allocation7], 4
      %s244 = int_to_ptr.vmem [resolvable:$true] %s243
      %s245 = sshll.u32 %s6, 4
      %s246 = int_to_ptr.hbm [resolvable:$true] %s245
      %248 = dma.vmem_to_hbm [thread:$0]  %s244, 128, %s246, [#allocation4]
    $region37: #{tpu_custom_call.1} parent=1 // pred_fallthru
      _
    // Predicated region
    $region38: #{tpu_custom_call.1} parent=1 // pred_check
      _
    $region39: #{tpu_custom_call.1} parent=1 // pred_check_branch
      %250 = sbr.rel (0) target = $region41
    $region40: #{tpu_custom_call.1} parent=1 // pred_region
      %252 = dma.done [#allocation4], 128
    $region41: #{tpu_custom_call.1} parent=1 // pred_fallthru
      _
    %253 = vsyncpa [#allocation3], 1
    %254 = vsyncpa [#allocation6], 1
    %255 = vsyncpa [#allocation4], 1

// kernel: tpu_custom_call.1
$region0: #{tpu_custom_call.1}
  #allocation0 [shape = 'u32[]', space=smem, size = 0x4, offset = 0x4, fixed_abs, tag = 'smem constant byte address 0x4 - core index']
  #allocation1 [shape = 'u32[72,128]{1,0:T(1,128)}', space=vmem, size = 0x9000, scoped, tag = 'internal scratch']
  %s0 = inlined_call_operand.hbm [shape: f32[8,64], index: 0, kind: input, shape index: {}]
  %s1 = inlined_call_operand.vmem [shape: bf16[64,64], index: 1, kind: input, shape index: {}]
  %s2 = inlined_call_operand.vmem [shape: bf16[64,32], index: 2, kind: input, shape index: {}]
  %s3 = inlined_call_operand.vmem [shape: bf16[32,32], index: 3, kind: input, shape index: {}]
  %s4 = inlined_call_operand.hbm [shape: bf16[32,64], index: 4, kind: input, shape index: {}]
  %s5 = inlined_call_operand.vmem [shape: f32[1,64], index: 5, kind: input, shape index: {}]
  %s6 = inlined_call_operand.hbm [shape: f32[8,128], index: 6, kind: output, shape index: {}]
  %s7 = sld [smem:[#allocation0]]
  $region42: #{tpu_custom_call.1} parent=0
    _
  %s9 = ssub.s32 1, %s7
  %s10 = scalar_select 0, %s9, %s7
  $region1: #{tpu_custom_call.1} parent=0
    #allocation2 [shape = 'u8[4096]{0}', space=vmem, size = 0x1000, scoped, tag = 'input window, operand 0, single buffered']
    #allocation3 [shape = 's32[1]{0}', space=sflag, size = 0x4, scoped, tag = 'scoped memory for tpu_custom_call.1']
    #allocation4 [shape = 's32[1]{0}', space=sflag, size = 0x4, scoped, tag = 'scoped memory for tpu_custom_call.1']
    #allocation5 [shape = 'u8[8192]{0}', space=vmem, size = 0x2000, scoped, tag = 'input window, operand 4, single buffered']
    #allocation6 [shape = 's32[1]{0}', space=sflag, size = 0x4, scoped, tag = 'scoped memory for tpu_custom_call.1']
    #allocation7 [shape = 'u8[4096]{0}', space=vmem, size = 0x1000, scoped, tag = 'output window, operand 0, single buffered']
    %11 = vsyncpa [#allocation3], 0
    %12 = vsyncpa [#allocation6], 0
    %13 = vsyncpa [#allocation4], 0
    // Predicated region
    $region2: #{tpu_custom_call.1} parent=1 // pred_check
      _
    $region3: #{tpu_custom_call.1} parent=1 // pred_check_branch
      %15 = sbr.rel (0) target = $region5
    $region4: #{tpu_custom_call.1} parent=1 // pred_region
      %17 = vsyncadd [#allocation3], 0
      %s19 = sshll.u32 %s0, 4
      %s20 = int_to_ptr.hbm [resolvable:$true] %s19
      %s21 = sshll.u32 [#allocation2], 4
      %s22 = int_to_ptr.vmem [resolvable:$true] %s21
      %24 = dma.hbm_to_vmem [thread:$0]  %s20, 128, %s22, [#allocation3]
    $region5: #{tpu_custom_call.1} parent=1 // pred_fallthru
      _
    // Predicated region
    $region6: #{tpu_custom_call.1} parent=1 // pred_check
      _
    $region7: #{tpu_custom_call.1} parent=1 // pred_check_branch
      %26 = sbr.rel (0) target = $region9
    $region8: #{tpu_custom_call.1} parent=1 // pred_region
      _
    $region9: #{tpu_custom_call.1} parent=1 // pred_fallthru
      _
    // Predicated region
    $region10: #{tpu_custom_call.1} parent=1 // pred_check
      _
    $region11: #{tpu_custom_call.1} parent=1 // pred_check_branch
      %28 = sbr.rel (0) target = $region13
    $region12: #{tpu_custom_call.1} parent=1 // pred_region
      _
    $region13: #{tpu_custom_call.1} parent=1 // pred_fallthru
      _
    // Predicated region
    $region14: #{tpu_custom_call.1} parent=1 // pred_check
      _
    $region15: #{tpu_custom_call.1} parent=1 // pred_check_branch
      %30 = sbr.rel (0) target = $region17
    $region16: #{tpu_custom_call.1} parent=1 // pred_region
      _
    $region17: #{tpu_custom_call.1} parent=1 // pred_fallthru
      _
    // Predicated region
    $region18: #{tpu_custom_call.1} parent=1 // pred_check
      _
    $region19: #{tpu_custom_call.1} parent=1 // pred_check_branch
      %32 = sbr.rel (0) target = $region21
    $region20: #{tpu_custom_call.1} parent=1 // pred_region
      %34 = vsyncadd [#allocation6], 0
      %s35 = sshll.u32 %s4, 4
      %s36 = int_to_ptr.hbm [resolvable:$true] %s35
      %s37 = sshll.u32 [#allocation5], 4
      %s38 = int_to_ptr.vmem [resolvable:$true] %s37
      %43 = dma.hbm_to_vmem [thread:$0]  %s36, 256, %s38, [#allocation6], 64, 64, 4
    $region21: #{tpu_custom_call.1} parent=1 // pred_fallthru
      _
    // Predicated region
    $region22: #{tpu_custom_call.1} parent=1 // pred_check
      _
    $region23: #{tpu_custom_call.1} parent=1 // pred_check_branch
      %45 = sbr.rel (0) target = $region25
    $region24: #{tpu_custom_call.1} parent=1 // pred_region
      _
    $region25: #{tpu_custom_call.1} parent=1 // pred_fallthru
      _
    // Predicated region
    $region26: #{tpu_custom_call.1} parent=1 // pred_check
      _
    $region27: #{tpu_custom_call.1} parent=1 // pred_check_branch
      %47 = sbr.rel (0) target = $region29
    $region28: #{tpu_custom_call.1} parent=1 // pred_region
      %49 = dma.done [#allocation3], 128
    $region29: #{tpu_custom_call.1} parent=1 // pred_fallthru
      _
    // Predicated region
    $region30: #{tpu_custom_call.1} parent=1 // pred_check
      _
    $region31: #{tpu_custom_call.1} parent=1 // pred_check_branch
      %51 = sbr.rel (0) target = $region33
    $region32: #{tpu_custom_call.1} parent=1 // pred_region
      %53 = dma.done [#allocation6], 256
    $region33: #{tpu_custom_call.1} parent=1 // pred_fallthru
      _
    %v55 = vld [vmem:[#allocation2] sm:$0xff]
    %v56 = vpack.c.bf16 %v55, %v55
    %v57 = vld [vmem:[%s1] sm:$0xf]
    %v58 = vld [vmem:[%s1 + $0x4] sm:$0xf]
    %v59 = vld [vmem:[%s1 + $0x8] sm:$0xf]
    %v60 = vld [vmem:[%s1 + $0xc] sm:$0xf]
    %v61 = vld [vmem:[%s1 + $0x10] sm:$0xf]
    %v62 = vld [vmem:[%s1 + $0x14] sm:$0xf]
    %v63 = vld [vmem:[%s1 + $0x18] sm:$0xf]
    %v64 = vld [vmem:[%s1 + $0x1c] sm:$0xf]
    %v73 = vunpack.c.l.b16 %v57
    %v74 = vunpack.c.l.b16 %v58
    %v75 = vunpack.c.l.b16 %v59
    %v76 = vunpack.c.l.b16 %v60
    %v77 = vunpack.c.l.b16 %v61
    %v78 = vunpack.c.l.b16 %v62
    %v79 = vunpack.c.l.b16 %v63
    %v80 = vunpack.c.l.b16 %v64
    %v81 = vpack.c.b16 %v74, %v73
    %v82 = vpack.c.b16 %v76, %v75
    %v83 = vpack.c.b16 %v78, %v77
    %v84 = vpack.c.b16 %v80, %v79
    %vm89 = vcmask 523264
    %v91 = vsel %vm89, %v56, 0
    %93 = vmatpush.bf16.msra.mxu0 0
    %94 = vmatpush.bf16.msra.mxu0 0
    %95 = vmatpush.bf16.msra.mxu0 0
    %96 = vmatpush.bf16.msra.mxu0 0
    %97 = vmatpush.bf16.msra.mxu0 %v84
    %98 = vmatpush.bf16.msra.mxu0 %v83
    %99 = vmatpush.bf16.msra.mxu0 %v82
    %100 = vmatpush.bf16.msra.mxu0 %v81
    %101 = vmatmul.bf16.gmra.mxu0 %v91
    %v102 = vpop.f32.mrf.mxu0
    %v103 = vadd.f32 0.0, %v102
    %v104 = vpop.f32.mrf.mxu0
    %105 = vdwg.mxu0
    %v106 = vpack.c.bf16 %v103, %v103
    %v107 = vld [vmem:[%s2] sm:$0xf]
    %v108 = vld [vmem:[%s2 + $0x4] sm:$0xf]
    %v109 = vld [vmem:[%s2 + $0x8] sm:$0xf]
    %v110 = vld [vmem:[%s2 + $0xc] sm:$0xf]
    %v111 = vld [vmem:[%s2 + $0x10] sm:$0xf]
    %v112 = vld [vmem:[%s2 + $0x14] sm:$0xf]
    %v113 = vld [vmem:[%s2 + $0x18] sm:$0xf]
    %v114 = vld [vmem:[%s2 + $0x1c] sm:$0xf]
    %v123 = vunpack.c.l.b16 %v107
    %v124 = vunpack.c.l.b16 %v108
    %v125 = vunpack.c.l.b16 %v109
    %v126 = vunpack.c.l.b16 %v110
    %v127 = vunpack.c.l.b16 %v111
    %v128 = vunpack.c.l.b16 %v112
    %v129 = vunpack.c.l.b16 %v113
    %v130 = vunpack.c.l.b16 %v114
    %v131 = vpack.c.b16 %v124, %v123
    %v132 = vpack.c.b16 %v126, %v125
    %v133 = vpack.c.b16 %v128, %v127
    %v134 = vpack.c.b16 %v130, %v129
    %v140 = vsel %vm89, %v106, 0
    %142 = vmatpush.bf16.msra.mxu0 0
    %143 = vmatpush.bf16.msra.mxu0 0
    %144 = vmatpush.bf16.msra.mxu0 0
    %145 = vmatpush.bf16.msra.mxu0 0
    %146 = vmatpush.bf16.msra.mxu0 %v134
    %147 = vmatpush.bf16.msra.mxu0 %v133
    %148 = vmatpush.bf16.msra.mxu0 %v132
    %149 = vmatpush.bf16.msra.mxu0 %v131
    %150 = vmatmul.bf16.gmra.mxu0 %v140
    %v151 = vpop.f32.mrf.mxu0
    %v152 = vadd.f32 0.0, %v151
    %v153 = vpop.f32.mrf.mxu0
    %154 = vdwg.mxu0
    %v155 = vmul.f32 %v152, 0.2
    %v156 = vmax.f32 %v152, %v155
    %v157 = vpack.c.bf16 %v156, %v156
    %v158 = vld [vmem:[%s3] sm:$0xf]
    %v159 = vld [vmem:[%s3 + $0x4] sm:$0xf]
    %v160 = vld [vmem:[%s3 + $0x8] sm:$0xf]
    %v161 = vld [vmem:[%s3 + $0xc] sm:$0xf]
    %v166 = vunpack.c.l.b16 %v158
    %v167 = vunpack.c.l.b16 %v159
    %v168 = vunpack.c.l.b16 %v160
    %v169 = vunpack.c.l.b16 %v161
    %v170 = vpack.c.b16 %v167, %v166
    %v171 = vpack.c.b16 %v169, %v168
    %vm174 = vcmask 261120
    %v176 = vsel %vm174, %v157, 0
    %178 = vmatpush.bf16.msra.mxu0 0
    %179 = vmatpush.bf16.msra.mxu0 0
    %180 = vmatpush.bf16.msra.mxu0 0
    %181 = vmatpush.bf16.msra.mxu0 0
    %182 = vmatpush.bf16.msra.mxu0 0
    %183 = vmatpush.bf16.msra.mxu0 0
    %184 = vmatpush.bf16.msra.mxu0 %v171
    %185 = vmatpush.bf16.msra.mxu0 %v170
    %186 = vmatmul.bf16.gmra.mxu0 %v176
    %v187 = vpop.f32.mrf.mxu0
    %v188 = vadd.f32 0.0, %v187
    %v189 = vpop.f32.mrf.mxu0
    %190 = vdwg.mxu0
    %v191 = vmul.f32 %v188, 0.2
    %v192 = vmax.f32 %v188, %v191
    %v193 = vpack.c.bf16 %v192, %v192
    %v194 = vld [vmem:[#allocation5] sm:$0xf]
    %v195 = vld [vmem:[#allocation5 + $0x4] sm:$0xf]
    %v196 = vld [vmem:[#allocation5 + $0x8] sm:$0xf]
    %v197 = vld [vmem:[#allocation5 + $0xc] sm:$0xf]
    %v198 = vld [vmem:[%s5] sm:$0x1]
    %v200 = vperm.slane %v198, 0
    %v206 = vunpack.c.l.b16 %v194
    %v207 = vunpack.c.l.b16 %v195
    %v208 = vunpack.c.l.b16 %v196
    %v209 = vunpack.c.l.b16 %v197
    %v210 = vpack.c.b16 %v207, %v206
    %v211 = vpack.c.b16 %v209, %v208
    %v215 = vsel %vm174, %v193, 0
    %217 = vmatpush.bf16.msra.mxu0 0
    %218 = vmatpush.bf16.msra.mxu0 0
    %219 = vmatpush.bf16.msra.mxu0 0
    %220 = vmatpush.bf16.msra.mxu0 0
    %221 = vmatpush.bf16.msra.mxu0 0
    %222 = vmatpush.bf16.msra.mxu0 0
    %223 = vmatpush.bf16.msra.mxu0 %v211
    %224 = vmatpush.bf16.msra.mxu0 %v210
    %225 = vmatmul.bf16.gmra.mxu0 %v215
    %v226 = vpop.f32.mrf.mxu0
    %v227 = vadd.f32 %v200, %v226
    %v228 = vpop.f32.mrf.mxu0
    %229 = vdwg.mxu0
    %231 = vrot.lane.b32.xlu0 %v227, 32
    %v232 = vpop.permute.xlu0 %231
    %v234 = vsel %vm174, %v192, %v232
    %vm235 = vcmask 785408
    %v236 = vsel %vm235, %v234, 0.0
    %237 = vst [vmem:[#allocation7] sm:$0xff] %v236
    // Predicated region
    $region34: #{tpu_custom_call.1} parent=1 // pred_check
      _
    $region35: #{tpu_custom_call.1} parent=1 // pred_check_branch
      %239 = sbr.rel (0) target = $region37
    $region36: #{tpu_custom_call.1} parent=1 // pred_region
      %241 = vsyncadd [#allocation4], 0
      %s243 = sshll.u32 [#allocation7], 4
      %s244 = int_to_ptr.vmem [resolvable:$true] %s243
      %s245 = sshll.u32 %s6, 4
      %s246 = int_to_ptr.hbm [resolvable:$true] %s245
      %248 = dma.vmem_to_hbm [thread:$0]  %s244, 128, %s246, [#allocation4]
    $region37: #{tpu_custom_call.1} parent=1 // pred_fallthru
      _
    // Predicated region
    $region38: #{tpu_custom_call.1} parent=1 // pred_check
      _
    $region39: #{tpu_custom_call.1} parent=1 // pred_check_branch
      %250 = sbr.rel (0) target = $region41
    $region40: #{tpu_custom_call.1} parent=1 // pred_region
      %252 = dma.done [#allocation4], 128
    $region41: #{tpu_custom_call.1} parent=1 // pred_fallthru
      _
    %253 = vsyncpa [#allocation3], 1
    %254 = vsyncpa [#allocation6], 1
    %255 = vsyncpa [#allocation4], 1

</llo_original>
